<compile_context>
chip_gen: v5e
topology: v5e:2x2
jax: 0.10.0
libtpu: 0.0.40
codegen_flags: <defaults>
</compile_context>

<pallas_src>
import functools

import jax
import jax.numpy as jnp
from jax.experimental import pallas as pl
from jax.experimental.pallas import tpu as pltpu


_MIB = 1 << 20
# Scoped-VMEM ceiling that is safe on every generation (v7x has 64 MiB
# physical per TensorCore; v5e/v6e have 128 MiB).
_VMEM_CEILING = 56 * _MIB
# If the double-buffered working set of the resident-XW aggregation exceeds
# this, fall back to the K-tiled variant.
_RESIDENT_BUDGET = 44 * _MIB


def _round_up(v, m):
    return ((v + m - 1) // m) * m


def _vmem_limit(nbytes):
    """Explicit scoped-VMEM limit: actual need + slack, floored at the 32 MiB
    default (raises v5e's 16 MiB default) and capped for v7x."""
    return int(min(max(nbytes + 4 * _MIB, 32 * _MIB), _VMEM_CEILING))


def _div_tile(total, cap):
    """Largest multiple of 128 that divides `total` and is <= cap."""
    t = max(128, (min(cap, total) // 128) * 128)
    while total % t != 0:
        t -= 128
    return t


# ----------------------------- Pallas kernels ------------------------------ #

def _xw_kernel(x_ref, w_ref, o_ref):
    """Feature transform for one tile of node rows: o = x_tile @ W."""
    o_ref[...] = jnp.dot(
        x_ref[...], w_ref[...], preferred_element_type=jnp.float32
    ).astype(o_ref.dtype)


def _agg_resident_kernel(a_ref, xw_ref, b_ref, o_ref):
    """Resident-XW aggregation: o = relu(A_rows @ XW + b) in one MXU pass.

    a_ref  : (tm, n_p)     row slab of the normalized adjacency
    xw_ref : (n_p, fo_p)   full transformed features (VMEM-resident)
    b_ref  : (1, fo_p)     bias row (f32)
    o_ref  : (tm, fo_p)    output tile
    """
    acc = jnp.dot(a_ref[...], xw_ref[...], preferred_element_type=jnp.float32)
    o_ref[...] = jnp.maximum(acc + b_ref[...], 0.0).astype(o_ref.dtype)


def _agg_ktiled_kernel(a_ref, xw_ref, b_ref, o_ref, acc_ref):
    """K-tiled fallback: acc += A_tile @ XW_tile; epilogue bias + ReLU."""
    k = pl.program_id(1)

    @pl.when(k == 0)
    def _():
        acc_ref[...] = jnp.zeros_like(acc_ref)

    acc_ref[...] += jnp.dot(
        a_ref[...], xw_ref[...], preferred_element_type=jnp.float32)

    @pl.when(k == pl.num_programs(1) - 1)
    def _():
        out = acc_ref[...] + b_ref[...]
        o_ref[...] = jnp.maximum(out, 0.0).astype(o_ref.dtype)


# --------------------------- pallas_call wrappers --------------------------- #

def xw_matmul(x, w, *, out_dtype, tm):
    """XW = X @ W, tiled over node rows (computed once per layer)."""
    n_p, fi_p = x.shape
    fo_p = w.shape[1]
    ib = jnp.dtype(x.dtype).itemsize
    ob = jnp.dtype(out_dtype).itemsize
    vmem = _vmem_limit(2 * (tm * fi_p * ib + fi_p * fo_p * ib + tm * fo_p * ob))
    # TODO(synk): pipeline_mode=pl.Buffered(1) on the grid-invariant W spec to
    # skip double-buffering it once hidden dims grow (v7x VMEM headroom).
    return pl.pallas_call(
        _xw_kernel,
        out_shape=jax.ShapeDtypeStruct((n_p, fo_p), out_dtype),
        grid=(n_p // tm,),
        in_specs=[
            pl.BlockSpec((tm, fi_p), lambda i: (i, 0)),     # X row tile
            pl.BlockSpec((fi_p, fo_p), lambda i: (0, 0)),   # full W (fetched once)
        ],
        out_specs=pl.BlockSpec((tm, fo_p), lambda i: (i, 0)),
        compiler_params=pltpu.CompilerParams(
            dimension_semantics=("parallel",),
            vmem_limit_bytes=vmem),
        cost_estimate=pl.CostEstimate(
            flops=2 * n_p * fi_p * fo_p,
            transcendentals=0,
            bytes_accessed=(n_p * fi_p + fi_p * fo_p) * ib + n_p * fo_p * ob),
    )(x, w)


def _aggregate_resident(a_hat, xw, bias_row, *, out_dtype, tm):
    """relu(A_hat @ XW + b) with XW fully VMEM-resident (no K grid axis)."""
    n_p = a_hat.shape[0]
    fo_p = xw.shape[1]
    ab = jnp.dtype(a_hat.dtype).itemsize
    xb = jnp.dtype(xw.dtype).itemsize
    ob = jnp.dtype(out_dtype).itemsize
    vmem = _vmem_limit(2 * tm * n_p * ab + 2 * n_p * fo_p * xb
                       + 2 * tm * fo_p * ob + 2 * fo_p * 4)
    # TODO(synk): block-sparse skipping of all-zero A_hat row slabs via
    # PrefetchScalarGridSpec (per-row-block nonzero column-block lists) — the
    # dominant lever for large sparse graphs; dense slabs used here.
    # TODO(synk): fp8 storage for A_hat (values in [0,1]) to halve the
    # dominant HBM stream; native MXU fp8 on v7x, upcast-after-DMA elsewhere.
    return pl.pallas_call(
        _agg_resident_kernel,
        out_shape=jax.ShapeDtypeStruct((n_p, fo_p), out_dtype),
        grid=(n_p // tm,),
        in_specs=[
            pl.BlockSpec((tm, n_p), lambda i: (i, 0)),      # A_hat row slab
            pl.BlockSpec((n_p, fo_p), lambda i: (0, 0)),    # resident XW
            pl.BlockSpec((1, fo_p), lambda i: (0, 0)),      # bias
        ],
        out_specs=pl.BlockSpec((tm, fo_p), lambda i: (i, 0)),
        compiler_params=pltpu.CompilerParams(
            dimension_semantics=("parallel",),
            vmem_limit_bytes=vmem),
        cost_estimate=pl.CostEstimate(
            flops=2 * n_p * n_p * fo_p,
            transcendentals=0,
            bytes_accessed=n_p * n_p * ab + n_p * fo_p * (xb + ob) + fo_p * 4),
    )(a_hat, xw, bias_row)


def _aggregate_ktiled(a_hat, xw, bias_row, *, out_dtype, tm, tk):
    """K-tiled fallback for graphs whose XW cannot stay VMEM-resident."""
    n_p = a_hat.shape[0]
    fo_p = xw.shape[1]
    ab = jnp.dtype(a_hat.dtype).itemsize
    xb = jnp.dtype(xw.dtype).itemsize
    ob = jnp.dtype(out_dtype).itemsize
    vmem = _vmem_limit(2 * tm * tk * ab + 2 * tk * fo_p * xb
                       + 2 * tm * fo_p * ob + tm * fo_p * 4 + 2 * fo_p * 4)
    k_steps = n_p // tm
    return pl.pallas_call(
        _agg_ktiled_kernel,
        out_shape=jax.ShapeDtypeStruct((n_p, fo_p), out_dtype),
        grid=(n_p // tm, n_p // tk),
        in_specs=[
            pl.BlockSpec((tm, tk), lambda i, k: (i, k)),     # A_hat tile
            pl.BlockSpec((tk, fo_p), lambda i, k: (k, 0)),   # XW K-slice
            pl.BlockSpec((1, fo_p), lambda i, k: (0, 0)),    # bias
        ],
        out_specs=pl.BlockSpec((tm, fo_p), lambda i, k: (i, 0)),
        scratch_shapes=[pltpu.VMEM((tm, fo_p), jnp.float32)],
        compiler_params=pltpu.CompilerParams(
            dimension_semantics=("parallel", "arbitrary"),
            vmem_limit_bytes=vmem),
        cost_estimate=pl.CostEstimate(
            flops=2 * n_p * n_p * fo_p,
            transcendentals=0,
            # XW really is streamed once per row block with this grid order.
            bytes_accessed=n_p * n_p * ab
                           + k_steps * n_p * fo_p * xb
                           + n_p * fo_p * ob + fo_p * 4),
    )(a_hat, xw, bias_row)


def aggregate(a_hat, xw, bias_row, *, out_dtype, tm, tk):
    n_p, fo_p = xw.shape
    ab = jnp.dtype(a_hat.dtype).itemsize
    xb = jnp.dtype(xw.dtype).itemsize
    ob = jnp.dtype(out_dtype).itemsize
    resident_bytes = (2 * tm * n_p * ab + 2 * n_p * fo_p * xb
                      + 2 * tm * fo_p * ob)
    if resident_bytes <= _RESIDENT_BUDGET:
        return _aggregate_resident(a_hat, xw, bias_row,
                                   out_dtype=out_dtype, tm=tm)
    tk_eff = _div_tile(n_p, tk)
    return _aggregate_ktiled(a_hat, xw, bias_row,
                             out_dtype=out_dtype, tm=tm, tk=tk_eff)


# ------------------------------ JAX glue ----------------------------------- #

def build_norm_adj(edge_index, edge_weight, num_nodes, padded_nodes, dtype):
    """Dense D^{-1/2}(A + I)D^{-1/2}, matching PyG gcn_norm (source_to_target).

    out[dst] += norm * x[src]  <=>  A_hat[dst, src] = norm

    Built directly into the padded (padded_nodes, padded_nodes) buffer and
    cast to `dtype` in a single pass (degree math stays in f32).
    """
    src = edge_index[0]
    dst = edge_index[1]
    if edge_weight is None:
        edge_weight = jnp.ones(src.shape[0], dtype=jnp.float32)
    loop = jnp.arange(num_nodes, dtype=src.dtype)
    src = jnp.concatenate([src, loop])
    dst = jnp.concatenate([dst, loop])
    w = jnp.concatenate(
        [edge_weight.astype(jnp.float32), jnp.ones(num_nodes, jnp.float32)])

    deg = jnp.zeros(num_nodes, jnp.float32).at[dst].add(w)
    dinv_sqrt = jnp.where(deg > 0, 1.0 / jnp.sqrt(deg), 0.0)
    norm = dinv_sqrt[src] * w * dinv_sqrt[dst]

    a_hat = jnp.zeros((padded_nodes, padded_nodes), jnp.float32)
    a_hat = a_hat.at[dst, src].add(norm)
    return a_hat.astype(dtype)


@functools.partial(jax.jit, static_argnames=("compute_dtype", "tm", "tk"))
def gconv_forward(x, edge_index, edge_weight, weights, biases,
                  *, compute_dtype=jnp.bfloat16, tm=256, tk=1024):
    """GConv.forward: stacked (GCNConv + ReLU) layers, Pallas hot path.

    compute_dtype: MXU operand dtype (bf16 default; accumulation is f32).
    tm: output-row tile (capped for small graphs so the row grid keeps >= 2
        blocks and padding of the O(N^2) A_hat stays modest).
    tk: reduction tile for the K-tiled fallback path.
    """
    n, f_in = x.shape

    # Row tile: multiple of 128, at most tm, and small enough that the row
    # grid has >= 2 blocks whenever the graph allows it (v7x TC sharding).
    n128 = _round_up(n, 128)
    tm_eff = max(128, min(tm, max(128, (n128 // 2 // 128) * 128)))
    n_p = _round_up(n, tm_eff)                    # node padding: < tm_eff extra
    f_in_p = _round_up(f_in, 128)                 # lane-dense feature dims

    a_pad = build_norm_adj(edge_index, edge_weight, n, n_p, compute_dtype)

    z = jnp.pad(x, ((0, n_p - n), (0, f_in_p - f_in))).astype(compute_dtype)
    f_out = f_in
    for w, b in zip(weights, biases):
        fi, f_out = w.shape
        fi_p = _round_up(fi, 128)
        fo_p = _round_up(f_out, 128)
        w_pad = jnp.pad(w.astype(jnp.float32),
                        ((0, fi_p - fi), (0, fo_p - f_out))).astype(compute_dtype)
        b_pad = jnp.pad(b.astype(jnp.float32),
                        (0, fo_p - f_out)).reshape(1, fo_p)

        xw = xw_matmul(z, w_pad, out_dtype=compute_dtype, tm=tm_eff)   # X @ W (once)
        z = aggregate(a_pad, xw, b_pad, out_dtype=compute_dtype,       # relu(A@XW + b)
                      tm=tm_eff, tk=tk)

    return z[:n, :f_out].astype(jnp.float32)


def gconv_reference(x, edge_index, edge_weight, weights, biases):
    """Plain-JAX f32 reference of the same math, for a sanity check."""
    n = x.shape[0]
    a_hat = build_norm_adj(edge_index, edge_weight, n, n, jnp.float32)
    z = x
    for w, b in zip(weights, biases):
        z = jnp.maximum(a_hat @ (z @ w) + b[None, :], 0.0)
    return z


# ------------------------------- main -------------------------------------- #

if __name__ == "__main__":
    key = jax.random.PRNGKey(0)
    k_x, k_src, k_dst, k_w1, k_w2 = jax.random.split(key, 5)

    # Small, module-consistent shapes.
    num_nodes = 16
    num_edges = 32
    input_dim = 32
    hidden_dim = 32
    num_layers = 2

    x = jax.random.normal(k_x, (num_nodes, input_dim), jnp.float32)
    src = jax.random.randint(k_src, (num_edges,), 0, num_nodes, jnp.int32)
    dst = jax.random.randint(k_dst, (num_edges,), 0, num_nodes, jnp.int32)
    edge_index = jnp.stack([src, dst])
    edge_weight = None  # defaults to ones, as in the PyTorch module

    # Deterministic parameter init (glorot for weights, zeros for bias,
    # matching GCNConv defaults).
    def glorot(k, shape):
        lim = (6.0 / (shape[0] + shape[1])) ** 0.5
        return jax.random.uniform(k, shape, jnp.float32, -lim, lim)

    weights = [glorot(k_w1, (input_dim, hidden_dim)),
               glorot(k_w2, (hidden_dim, hidden_dim))]
    biases = [jnp.zeros((hidden_dim,), jnp.float32) for _ in range(num_layers)]

    z_ref = gconv_reference(x, edge_index, edge_weight, weights, biases)

    # Default path: bf16 MXU operands, f32 accumulation + epilogue.
    z_bf16 = gconv_forward(x, edge_index, edge_weight, weights, biases)
    jax.block_until_ready(z_bf16)
    assert z_bf16.shape == (num_nodes, hidden_dim)
    assert jnp.allclose(z_bf16, z_ref, atol=5e-2, rtol=5e-2)

    # Full-f32 path: tight tolerance against the reference.
    z_f32 = gconv_forward(x, edge_index, edge_weight, weights, biases,
                          compute_dtype=jnp.float32)
    jax.block_until_ready(z_f32)
    assert jnp.allclose(z_f32, z_ref, atol=1e-4, rtol=1e-4)

    print("KERNEL_OK")
</pallas_src>

<mosaic_0001>
module attributes {stable_mosaic.version = 11 : i64} {
  func.func @_xw_kernel(%arg0: i32, %arg1: memref<128x128xbf16, #tpu.memory_space<vmem>>, %arg2: memref<128x128xbf16, #tpu.memory_space<vmem>>, %arg3: memref<128x128xbf16, #tpu.memory_space<vmem>>) attributes {dimension_semantics = [#tpu.dimension_semantics<parallel>], iteration_bounds = array<i64: 1>, scalar_prefetch = 0 : i64, scratch_operands = 0 : i64, tpu.core_type = #tpu.core_type<tc>, window_params = [{transform_indices = @transform_0, window_bounds = array<i64: 128, 128>}, {pipeline_mode = #tpu.pipeline_mode<synchronous>, transform_indices = @transform_1, window_bounds = array<i64: 128, 128>}, {transform_indices = @transform_2, window_bounds = array<i64: 128, 128>}]} {
    %c0 = arith.constant 0 : index
    %c0_0 = arith.constant 0 : index
    %0 = vector.load %arg1[%c0, %c0_0] : memref<128x128xbf16, #tpu.memory_space<vmem>>, vector<128x128xbf16>
    %c0_1 = arith.constant 0 : index
    %c0_2 = arith.constant 0 : index
    %1 = vector.load %arg2[%c0_1, %c0_2] : memref<128x128xbf16, #tpu.memory_space<vmem>>, vector<128x128xbf16>
    %cst = arith.constant dense<0.000000e+00> : vector<128x128xf32>
    %2 = tpu.matmul %0, %1, %cst {dimension_numbers = #tpu.dot_dimension_numbers<[1], [0], [0], [1], [0, 0, 1, 1], [], []>} : vector<128x128xbf16>, vector<128x128xbf16>, vector<128x128xf32> -> vector<128x128xf32>
    %3 = arith.truncf %2 : vector<128x128xf32> to vector<128x128xbf16>
    %c0_3 = arith.constant 0 : index
    %c0_4 = arith.constant 0 : index
    %4 = vector.load %arg3[%c0_3, %c0_4] : memref<128x128xbf16, #tpu.memory_space<vmem>>, vector<128x128xbf16>
    tpu.vector_store %arg3[%c0_3, %c0_4], %3 {strides = array<i32>} : memref<128x128xbf16, #tpu.memory_space<vmem>>, vector<128x128xbf16>,
    return
  }
  func.func @transform_0(%arg0: i32) -> (i32, i32) {
    %c0_i32 = arith.constant 0 : i32
    %c0_i32_0 = arith.constant 0 : i32
    return %arg0, %c0_i32 : i32, i32
  }
  func.func @transform_1(%arg0: i32) -> (i32, i32) {
    %c0_i32 = arith.constant 0 : i32
    %c0_i32_0 = arith.constant 0 : i32
    %c0_i32_1 = arith.constant 0 : i32
    return %c0_i32, %c0_i32_0 : i32, i32
  }
  func.func @transform_2(%arg0: i32) -> (i32, i32) {
    %c0_i32 = arith.constant 0 : i32
    %c0_i32_0 = arith.constant 0 : i32
    return %arg0, %c0_i32 : i32, i32
  }
}

module attributes {stable_mosaic.version = 11 : i64} {
  func.func @_agg_resident_kernel(%arg0: i32, %arg1: memref<128x128xbf16, #tpu.memory_space<vmem>>, %arg2: memref<128x128xbf16, #tpu.memory_space<vmem>>, %arg3: memref<1x128xf32, #tpu.memory_space<vmem>>, %arg4: memref<128x128xbf16, #tpu.memory_space<vmem>>) attributes {dimension_semantics = [#tpu.dimension_semantics<parallel>], iteration_bounds = array<i64: 1>, scalar_prefetch = 0 : i64, scratch_operands = 0 : i64, tpu.core_type = #tpu.core_type<tc>, window_params = [{transform_indices = @transform_0, window_bounds = array<i64: 128, 128>}, {pipeline_mode = #tpu.pipeline_mode<synchronous>, transform_indices = @transform_1, window_bounds = array<i64: 128, 128>}, {pipeline_mode = #tpu.pipeline_mode<synchronous>, transform_indices = @transform_2, window_bounds = array<i64: 1, 128>}, {transform_indices = @transform_3, window_bounds = array<i64: 128, 128>}]} {
    %c0 = arith.constant 0 : index
    %c0_0 = arith.constant 0 : index
    %0 = vector.load %arg1[%c0, %c0_0] : memref<128x128xbf16, #tpu.memory_space<vmem>>, vector<128x128xbf16>
    %c0_1 = arith.constant 0 : index
    %c0_2 = arith.constant 0 : index
    %1 = vector.load %arg2[%c0_1, %c0_2] : memref<128x128xbf16, #tpu.memory_space<vmem>>, vector<128x128xbf16>
    %cst = arith.constant dense<0.000000e+00> : vector<128x128xf32>
    %2 = tpu.matmul %0, %1, %cst {dimension_numbers = #tpu.dot_dimension_numbers<[1], [0], [0], [1], [0, 0, 1, 1], [], []>} : vector<128x128xbf16>, vector<128x128xbf16>, vector<128x128xf32> -> vector<128x128xf32>
    %c0_3 = arith.constant 0 : index
    %c0_4 = arith.constant 0 : index
    %3 = vector.load %arg3[%c0_3, %c0_4] : memref<1x128xf32, #tpu.memory_space<vmem>>, vector<1x128xf32>
    %4 = vector.broadcast %3 : vector<1x128xf32> to vector<128x128xf32>
    %5 = arith.addf %2, %4 : vector<128x128xf32>
    %cst_5 = arith.constant 0.000000e+00 : f32
    %6 = vector.broadcast %cst_5 : f32 to vector<128x128xf32>
    %7 = arith.maximumf %5, %6 : vector<128x128xf32>
    %8 = arith.truncf %7 : vector<128x128xf32> to vector<128x128xbf16>
    %c0_6 = arith.constant 0 : index
    %c0_7 = arith.constant 0 : index
    %9 = vector.load %arg4[%c0_6, %c0_7] : memref<128x128xbf16, #tpu.memory_space<vmem>>, vector<128x128xbf16>
    tpu.vector_store %arg4[%c0_6, %c0_7], %8 {strides = array<i32>} : memref<128x128xbf16, #tpu.memory_space<vmem>>, vector<128x128xbf16>,
    return
  }
  func.func @transform_0(%arg0: i32) -> (i32, i32) {
    %c0_i32 = arith.constant 0 : i32
    %c0_i32_0 = arith.constant 0 : i32
    return %arg0, %c0_i32 : i32, i32
  }
  func.func @transform_1(%arg0: i32) -> (i32, i32) {
    %c0_i32 = arith.constant 0 : i32
    %c0_i32_0 = arith.constant 0 : i32
    %c0_i32_1 = arith.constant 0 : i32
    return %c0_i32, %c0_i32_0 : i32, i32
  }
  func.func @transform_2(%arg0: i32) -> (i32, i32) {
    %c0_i32 = arith.constant 0 : i32
    %c0_i32_0 = arith.constant 0 : i32
    %c0_i32_1 = arith.constant 0 : i32
    return %c0_i32, %c0_i32_0 : i32, i32
  }
  func.func @transform_3(%arg0: i32) -> (i32, i32) {
    %c0_i32 = arith.constant 0 : i32
    %c0_i32_0 = arith.constant 0 : i32
    return %arg0, %c0_i32 : i32, i32
  }
}

</mosaic_0001>

<llo_original>
// kernel: mul.1
$region0: #{mul.1}
  #allocation0 [shape = 's32[1]{0}', space=sflag, size = 0x4, scoped, tag = 'scoped memory for mul.1']
  %s0 = inlined_call_operand.vmem [shape: f32[48], index: 0, kind: input, shape index: {}]
  %s1 = inlined_call_operand.vmem [shape: f32[48], index: 1, kind: input, shape index: {}]
  %s2 = inlined_call_operand.vmem [shape: f32[48], index: 2, kind: output, shape index: {}]
  %v3 = vld [vmem:[%s0] sm:$0x1]
  %v4 = vld [vmem:[%s1] sm:$0x1]
  %5 = xla_tuple %v3, %v4
  %6 = xla_tuple %5
  %v7 = vmul.f32 %v3, %v4
  %8 = xla_tuple %v7
  %9 = vst [vmem:[%s2] sm:$0x1] %v7

// kernel: gconv_forward.4
$region0: #{gconv_forward.4}
  #allocation0 [shape = 'u32[]', space=smem, size = 0x4, offset = 0x4, fixed_abs, tag = 'smem constant byte address 0x4 - core index']
  #allocation1 [shape = 'u32[72,128]{1,0:T(1,128)}', space=vmem, size = 0x9000, scoped, tag = 'internal scratch']
  %s0 = inlined_call_operand.vmem [shape: bf16[128,128], index: 0, kind: input, shape index: {}]
  %s1 = inlined_call_operand.vmem [shape: bf16[128,128], index: 1, kind: input, shape index: {}]
  %s2 = inlined_call_operand.vmem [shape: bf16[128,128], index: 2, kind: output, shape index: {}]
  %s3 = sld [smem:[#allocation0]]
  $region18: #{gconv_forward.4} parent=0
    _
  %s5 = ssub.s32 1, %s3
  %s6 = scalar_select 0, %s5, %s3
  // Predicated region
  $region2: #{gconv_forward.4} parent=0 // pred_check
    _
  $region3: #{gconv_forward.4} parent=0 // pred_check_branch
    %8 = sbr.rel (0) target = $region5
  $region4: #{gconv_forward.4} parent=0 // pred_region
    _
  $region5: #{gconv_forward.4} parent=0 // pred_fallthru
    _
  // Predicated region
  $region6: #{gconv_forward.4} parent=0 // pred_check
    _
  $region7: #{gconv_forward.4} parent=0 // pred_check_branch
    %10 = sbr.rel (0) target = $region9
  $region8: #{gconv_forward.4} parent=0 // pred_region
    _
  $region9: #{gconv_forward.4} parent=0 // pred_fallthru
    _
  %v11 = vld [vmem:[%s0] sm:$0xf]
  %v12 = vld [vmem:[%s0 + $0x4] sm:$0xf]
  %v13 = vld [vmem:[%s0 + $0x8] sm:$0xf]
  %v14 = vld [vmem:[%s0 + $0xc] sm:$0xf]
  %v15 = vld [vmem:[%s0 + $0x10] sm:$0xf]
  %v16 = vld [vmem:[%s0 + $0x14] sm:$0xf]
  %v17 = vld [vmem:[%s0 + $0x18] sm:$0xf]
  %v18 = vld [vmem:[%s0 + $0x1c] sm:$0xf]
  %v19 = vld [vmem:[%s0 + $0x20] sm:$0xf]
  %v20 = vld [vmem:[%s0 + $0x24] sm:$0xf]
  %v21 = vld [vmem:[%s0 + $0x28] sm:$0xf]
  %v22 = vld [vmem:[%s0 + $0x2c] sm:$0xf]
  %v23 = vld [vmem:[%s0 + $0x30] sm:$0xf]
  %v24 = vld [vmem:[%s0 + $0x34] sm:$0xf]
  %v25 = vld [vmem:[%s0 + $0x38] sm:$0xf]
  %v26 = vld [vmem:[%s0 + $0x3c] sm:$0xf]
  %v27 = vld [vmem:[%s1] sm:$0xf]
  %v28 = vld [vmem:[%s1 + $0x4] sm:$0xf]
  %v29 = vld [vmem:[%s1 + $0x8] sm:$0xf]
  %v30 = vld [vmem:[%s1 + $0xc] sm:$0xf]
  %v31 = vld [vmem:[%s1 + $0x10] sm:$0xf]
  %v32 = vld [vmem:[%s1 + $0x14] sm:$0xf]
  %v33 = vld [vmem:[%s1 + $0x18] sm:$0xf]
  %v34 = vld [vmem:[%s1 + $0x1c] sm:$0xf]
  %v35 = vld [vmem:[%s1 + $0x20] sm:$0xf]
  %v36 = vld [vmem:[%s1 + $0x24] sm:$0xf]
  %v37 = vld [vmem:[%s1 + $0x28] sm:$0xf]
  %v38 = vld [vmem:[%s1 + $0x2c] sm:$0xf]
  %v39 = vld [vmem:[%s1 + $0x30] sm:$0xf]
  %v40 = vld [vmem:[%s1 + $0x34] sm:$0xf]
  %v41 = vld [vmem:[%s1 + $0x38] sm:$0xf]
  %v42 = vld [vmem:[%s1 + $0x3c] sm:$0xf]
  %v59 = vunpack.c.l.b16 %v11
  %v60 = vunpack.c.l.b16 %v12
  %v61 = vunpack.c.l.b16 %v13
  %v62 = vunpack.c.l.b16 %v14
  %v63 = vunpack.c.l.b16 %v15
  %v64 = vunpack.c.l.b16 %v16
  %v65 = vunpack.c.l.b16 %v17
  %v66 = vunpack.c.l.b16 %v18
  %v67 = vunpack.c.l.b16 %v19
  %v68 = vunpack.c.l.b16 %v20
  %v69 = vunpack.c.l.b16 %v21
  %v70 = vunpack.c.l.b16 %v22
  %v71 = vunpack.c.l.b16 %v23
  %v72 = vunpack.c.l.b16 %v24
  %v73 = vunpack.c.l.b16 %v25
  %v74 = vunpack.c.l.b16 %v26
  %v75 = vpack.c.b16 %v60, %v59
  %v76 = vpack.c.b16 %v62, %v61
  %v77 = vpack.c.b16 %v64, %v63
  %v78 = vpack.c.b16 %v66, %v65
  %v79 = vpack.c.b16 %v68, %v67
  %v80 = vpack.c.b16 %v70, %v69
  %v81 = vpack.c.b16 %v72, %v71
  %v82 = vpack.c.b16 %v74, %v73
  %v107 = vunpack.c.l.b16 %v27
  %v108 = vunpack.c.l.b16 %v28
  %v109 = vunpack.c.l.b16 %v29
  %v110 = vunpack.c.l.b16 %v30
  %v111 = vunpack.c.l.b16 %v31
  %v112 = vunpack.c.l.b16 %v32
  %v113 = vunpack.c.l.b16 %v33
  %v114 = vunpack.c.l.b16 %v34
  %v115 = vunpack.c.l.b16 %v35
  %v116 = vunpack.c.l.b16 %v36
  %v117 = vunpack.c.l.b16 %v37
  %v118 = vunpack.c.l.b16 %v38
  %v119 = vunpack.c.l.b16 %v39
  %v120 = vunpack.c.l.b16 %v40
  %v121 = vunpack.c.l.b16 %v41
  %v122 = vunpack.c.l.b16 %v42
  %v123 = vpack.c.b16 %v108, %v107
  %v124 = vpack.c.b16 %v110, %v109
  %v125 = vpack.c.b16 %v112, %v111
  %v126 = vpack.c.b16 %v114, %v113
  %v127 = vpack.c.b16 %v116, %v115
  %v128 = vpack.c.b16 %v118, %v117
  %v129 = vpack.c.b16 %v120, %v119
  %v130 = vpack.c.b16 %v122, %v121
  %139 = vmatpush.bf16.msra.mxu0 %v130
  %140 = vmatpush.bf16.msra.mxu0 %v129
  %141 = vmatpush.bf16.msra.mxu0 %v128
  %142 = vmatpush.bf16.msra.mxu0 %v127
  %143 = vmatpush.bf16.msra.mxu0 %v126
  %144 = vmatpush.bf16.msra.mxu0 %v125
  %145 = vmatpush.bf16.msra.mxu0 %v124
  %146 = vmatpush.bf16.msra.mxu0 %v123
  %147 = vmatmul.bf16.gmra.mxu0 %v75
  %v148 = vpop.f32.mrf.mxu0
  %v149 = vadd.f32 0.0, %v148
  %v150 = vpop.f32.mrf.mxu0
  %v151 = vadd.f32 0.0, %v150
  %152 = vmatmul.bf16.gmra.mxu0 %v76
  %v153 = vpop.f32.mrf.mxu0
  %v154 = vadd.f32 0.0, %v153
  %v155 = vpop.f32.mrf.mxu0
  %v156 = vadd.f32 0.0, %v155
  %157 = vmatmul.bf16.gmra.mxu0 %v77
  %v158 = vpop.f32.mrf.mxu0
  %v159 = vadd.f32 0.0, %v158
  %v160 = vpop.f32.mrf.mxu0
  %v161 = vadd.f32 0.0, %v160
  %162 = vmatmul.bf16.gmra.mxu0 %v78
  %v163 = vpop.f32.mrf.mxu0
  %v164 = vadd.f32 0.0, %v163
  %v165 = vpop.f32.mrf.mxu0
  %v166 = vadd.f32 0.0, %v165
  %167 = vmatmul.bf16.gmra.mxu0 %v79
  %v168 = vpop.f32.mrf.mxu0
  %v169 = vadd.f32 0.0, %v168
  %v170 = vpop.f32.mrf.mxu0
  %v171 = vadd.f32 0.0, %v170
  %172 = vmatmul.bf16.gmra.mxu0 %v80
  %v173 = vpop.f32.mrf.mxu0
  %v174 = vadd.f32 0.0, %v173
  %v175 = vpop.f32.mrf.mxu0
  %v176 = vadd.f32 0.0, %v175
  %177 = vmatmul.bf16.gmra.mxu0 %v81
  %v178 = vpop.f32.mrf.mxu0
  %v179 = vadd.f32 0.0, %v178
  %v180 = vpop.f32.mrf.mxu0
  %v181 = vadd.f32 0.0, %v180
  %182 = vmatmul.bf16.gmra.mxu0 %v82
  %v183 = vpop.f32.mrf.mxu0
  %v184 = vadd.f32 0.0, %v183
  %v185 = vpop.f32.mrf.mxu0
  %v186 = vadd.f32 0.0, %v185
  %187 = vdwg.mxu0
  %v188 = vpack.c.bf16 %v149, %v149
  %v189 = vpack.c.bf16 %v151, %v151
  %v190 = vpack.c.bf16 %v154, %v154
  %v191 = vpack.c.bf16 %v156, %v156
  %v192 = vpack.c.bf16 %v159, %v159
  %v193 = vpack.c.bf16 %v161, %v161
  %v194 = vpack.c.bf16 %v164, %v164
  %v195 = vpack.c.bf16 %v166, %v166
  %v196 = vpack.c.bf16 %v169, %v169
  %v197 = vpack.c.bf16 %v171, %v171
  %v198 = vpack.c.bf16 %v174, %v174
  %v199 = vpack.c.bf16 %v176, %v176
  %v200 = vpack.c.bf16 %v179, %v179
  %v201 = vpack.c.bf16 %v181, %v181
  %v202 = vpack.c.bf16 %v184, %v184
  %v203 = vpack.c.bf16 %v186, %v186
  %204 = vst [vmem:[%s2] sm:$0xf] %v188
  %205 = vst [vmem:[%s2 + $0x4] sm:$0xf] %v189
  %206 = vst [vmem:[%s2 + $0x8] sm:$0xf] %v190
  %207 = vst [vmem:[%s2 + $0xc] sm:$0xf] %v191
  %208 = vst [vmem:[%s2 + $0x10] sm:$0xf] %v192
  %209 = vst [vmem:[%s2 + $0x14] sm:$0xf] %v193
  %210 = vst [vmem:[%s2 + $0x18] sm:$0xf] %v194
  %211 = vst [vmem:[%s2 + $0x1c] sm:$0xf] %v195
  %212 = vst [vmem:[%s2 + $0x20] sm:$0xf] %v196
  %213 = vst [vmem:[%s2 + $0x24] sm:$0xf] %v197
  %214 = vst [vmem:[%s2 + $0x28] sm:$0xf] %v198
  %215 = vst [vmem:[%s2 + $0x2c] sm:$0xf] %v199
  %216 = vst [vmem:[%s2 + $0x30] sm:$0xf] %v200
  %217 = vst [vmem:[%s2 + $0x34] sm:$0xf] %v201
  %218 = vst [vmem:[%s2 + $0x38] sm:$0xf] %v202
  %219 = vst [vmem:[%s2 + $0x3c] sm:$0xf] %v203
  // Predicated region
  $region10: #{gconv_forward.4} parent=0 // pred_check
    _
  $region11: #{gconv_forward.4} parent=0 // pred_check_branch
    %221 = sbr.rel (0) target = $region13
  $region12: #{gconv_forward.4} parent=0 // pred_region
    _
  $region13: #{gconv_forward.4} parent=0 // pred_fallthru
    _
  // Predicated region
  $region14: #{gconv_forward.4} parent=0 // pred_check
    _
  $region15: #{gconv_forward.4} parent=0 // pred_check_branch
    %223 = sbr.rel (0) target = $region17
  $region16: #{gconv_forward.4} parent=0 // pred_region
    _
  $region17: #{gconv_forward.4} parent=0 // pred_fallthru
    _

// kernel: gconv_forward.5
$region0: #{gconv_forward.5}
  #allocation0 [shape = 'u32[]', space=smem, size = 0x4, offset = 0x4, fixed_abs, tag = 'smem constant byte address 0x4 - core index']
  #allocation1 [shape = 'u32[72,128]{1,0:T(1,128)}', space=vmem, size = 0x9000, scoped, tag = 'internal scratch']
  %s0 = inlined_call_operand.vmem [shape: bf16[128,128], index: 0, kind: input, shape index: {}]
  %s1 = inlined_call_operand.vmem [shape: bf16[128,128], index: 1, kind: input, shape index: {}]
  %s2 = inlined_call_operand.vmem [shape: f32[1,128], index: 2, kind: input, shape index: {}]
  %s3 = inlined_call_operand.vmem [shape: bf16[128,128], index: 3, kind: output, shape index: {}]
  %s4 = sld [smem:[#allocation0]]
  $region22: #{gconv_forward.5} parent=0
    _
  %s6 = ssub.s32 1, %s4
  %s7 = scalar_select 0, %s6, %s4
  // Predicated region
  $region2: #{gconv_forward.5} parent=0 // pred_check
    _
  $region3: #{gconv_forward.5} parent=0 // pred_check_branch
    %9 = sbr.rel (0) target = $region5
  $region4: #{gconv_forward.5} parent=0 // pred_region
    _
  $region5: #{gconv_forward.5} parent=0 // pred_fallthru
    _
  // Predicated region
  $region6: #{gconv_forward.5} parent=0 // pred_check
    _
  $region7: #{gconv_forward.5} parent=0 // pred_check_branch
    %11 = sbr.rel (0) target = $region9
  $region8: #{gconv_forward.5} parent=0 // pred_region
    _
  $region9: #{gconv_forward.5} parent=0 // pred_fallthru
    _
  // Predicated region
  $region10: #{gconv_forward.5} parent=0 // pred_check
    _
  $region11: #{gconv_forward.5} parent=0 // pred_check_branch
    %13 = sbr.rel (0) target = $region13
  $region12: #{gconv_forward.5} parent=0 // pred_region
    _
  $region13: #{gconv_forward.5} parent=0 // pred_fallthru
    _
  %v14 = vld [vmem:[%s0] sm:$0xf]
  %v15 = vld [vmem:[%s0 + $0x4] sm:$0xf]
  %v16 = vld [vmem:[%s0 + $0x8] sm:$0xf]
  %v17 = vld [vmem:[%s0 + $0xc] sm:$0xf]
  %v18 = vld [vmem:[%s0 + $0x10] sm:$0xf]
  %v19 = vld [vmem:[%s0 + $0x14] sm:$0xf]
  %v20 = vld [vmem:[%s0 + $0x18] sm:$0xf]
  %v21 = vld [vmem:[%s0 + $0x1c] sm:$0xf]
  %v22 = vld [vmem:[%s0 + $0x20] sm:$0xf]
  %v23 = vld [vmem:[%s0 + $0x24] sm:$0xf]
  %v24 = vld [vmem:[%s0 + $0x28] sm:$0xf]
  %v25 = vld [vmem:[%s0 + $0x2c] sm:$0xf]
  %v26 = vld [vmem:[%s0 + $0x30] sm:$0xf]
  %v27 = vld [vmem:[%s0 + $0x34] sm:$0xf]
  %v28 = vld [vmem:[%s0 + $0x38] sm:$0xf]
  %v29 = vld [vmem:[%s0 + $0x3c] sm:$0xf]
  %v30 = vld [vmem:[%s1] sm:$0xf]
  %v31 = vld [vmem:[%s1 + $0x4] sm:$0xf]
  %v32 = vld [vmem:[%s1 + $0x8] sm:$0xf]
  %v33 = vld [vmem:[%s1 + $0xc] sm:$0xf]
  %v34 = vld [vmem:[%s1 + $0x10] sm:$0xf]
  %v35 = vld [vmem:[%s1 + $0x14] sm:$0xf]
  %v36 = vld [vmem:[%s1 + $0x18] sm:$0xf]
  %v37 = vld [vmem:[%s1 + $0x1c] sm:$0xf]
  %v38 = vld [vmem:[%s1 + $0x20] sm:$0xf]
  %v39 = vld [vmem:[%s1 + $0x24] sm:$0xf]
  %v40 = vld [vmem:[%s1 + $0x28] sm:$0xf]
  %v41 = vld [vmem:[%s1 + $0x2c] sm:$0xf]
  %v42 = vld [vmem:[%s1 + $0x30] sm:$0xf]
  %v43 = vld [vmem:[%s1 + $0x34] sm:$0xf]
  %v44 = vld [vmem:[%s1 + $0x38] sm:$0xf]
  %v45 = vld [vmem:[%s1 + $0x3c] sm:$0xf]
  %v46 = vld [vmem:[%s2] sm:$0x1]
  %v48 = vperm.slane %v46, 0
  %v66 = vunpack.c.l.b16 %v14
  %v67 = vunpack.c.l.b16 %v15
  %v68 = vunpack.c.l.b16 %v16
  %v69 = vunpack.c.l.b16 %v17
  %v70 = vunpack.c.l.b16 %v18
  %v71 = vunpack.c.l.b16 %v19
  %v72 = vunpack.c.l.b16 %v20
  %v73 = vunpack.c.l.b16 %v21
  %v74 = vunpack.c.l.b16 %v22
  %v75 = vunpack.c.l.b16 %v23
  %v76 = vunpack.c.l.b16 %v24
  %v77 = vunpack.c.l.b16 %v25
  %v78 = vunpack.c.l.b16 %v26
  %v79 = vunpack.c.l.b16 %v27
  %v80 = vunpack.c.l.b16 %v28
  %v81 = vunpack.c.l.b16 %v29
  %v82 = vpack.c.b16 %v67, %v66
  %v83 = vpack.c.b16 %v69, %v68
  %v84 = vpack.c.b16 %v71, %v70
  %v85 = vpack.c.b16 %v73, %v72
  %v86 = vpack.c.b16 %v75, %v74
  %v87 = vpack.c.b16 %v77, %v76
  %v88 = vpack.c.b16 %v79, %v78
  %v89 = vpack.c.b16 %v81, %v80
  %v114 = vunpack.c.l.b16 %v30
  %v115 = vunpack.c.l.b16 %v31
  %v116 = vunpack.c.l.b16 %v32
  %v117 = vunpack.c.l.b16 %v33
  %v118 = vunpack.c.l.b16 %v34
  %v119 = vunpack.c.l.b16 %v35
  %v120 = vunpack.c.l.b16 %v36
  %v121 = vunpack.c.l.b16 %v37
  %v122 = vunpack.c.l.b16 %v38
  %v123 = vunpack.c.l.b16 %v39
  %v124 = vunpack.c.l.b16 %v40
  %v125 = vunpack.c.l.b16 %v41
  %v126 = vunpack.c.l.b16 %v42
  %v127 = vunpack.c.l.b16 %v43
  %v128 = vunpack.c.l.b16 %v44
  %v129 = vunpack.c.l.b16 %v45
  %v130 = vpack.c.b16 %v115, %v114
  %v131 = vpack.c.b16 %v117, %v116
  %v132 = vpack.c.b16 %v119, %v118
  %v133 = vpack.c.b16 %v121, %v120
  %v134 = vpack.c.b16 %v123, %v122
  %v135 = vpack.c.b16 %v125, %v124
  %v136 = vpack.c.b16 %v127, %v126
  %v137 = vpack.c.b16 %v129, %v128
  %146 = vmatpush.bf16.msra.mxu0 %v137
  %147 = vmatpush.bf16.msra.mxu0 %v136
  %148 = vmatpush.bf16.msra.mxu0 %v135
  %149 = vmatpush.bf16.msra.mxu0 %v134
  %150 = vmatpush.bf16.msra.mxu0 %v133
  %151 = vmatpush.bf16.msra.mxu0 %v132
  %152 = vmatpush.bf16.msra.mxu0 %v131
  %153 = vmatpush.bf16.msra.mxu0 %v130
  %154 = vmatmul.bf16.gmra.mxu0 %v82
  %v155 = vpop.f32.mrf.mxu0
  %v156 = vadd.f32 %v48, %v155
  %v157 = vpop.f32.mrf.mxu0
  %v158 = vadd.f32 %v48, %v157
  %159 = vmatmul.bf16.gmra.mxu0 %v83
  %v160 = vpop.f32.mrf.mxu0
  %v161 = vadd.f32 %v48, %v160
  %v162 = vpop.f32.mrf.mxu0
  %v163 = vadd.f32 %v48, %v162
  %164 = vmatmul.bf16.gmra.mxu0 %v84
  %v165 = vpop.f32.mrf.mxu0
  %v166 = vadd.f32 %v48, %v165
  %v167 = vpop.f32.mrf.mxu0
  %v168 = vadd.f32 %v48, %v167
  %169 = vmatmul.bf16.gmra.mxu0 %v85
  %v170 = vpop.f32.mrf.mxu0
  %v171 = vadd.f32 %v48, %v170
  %v172 = vpop.f32.mrf.mxu0
  %v173 = vadd.f32 %v48, %v172
  %174 = vmatmul.bf16.gmra.mxu0 %v86
  %v175 = vpop.f32.mrf.mxu0
  %v176 = vadd.f32 %v48, %v175
  %v177 = vpop.f32.mrf.mxu0
  %v178 = vadd.f32 %v48, %v177
  %179 = vmatmul.bf16.gmra.mxu0 %v87
  %v180 = vpop.f32.mrf.mxu0
  %v181 = vadd.f32 %v48, %v180
  %v182 = vpop.f32.mrf.mxu0
  %v183 = vadd.f32 %v48, %v182
  %184 = vmatmul.bf16.gmra.mxu0 %v88
  %v185 = vpop.f32.mrf.mxu0
  %v186 = vadd.f32 %v48, %v185
  %v187 = vpop.f32.mrf.mxu0
  %v188 = vadd.f32 %v48, %v187
  %189 = vmatmul.bf16.gmra.mxu0 %v89
  %v190 = vpop.f32.mrf.mxu0
  %v191 = vadd.f32 %v48, %v190
  %v192 = vpop.f32.mrf.mxu0
  %v193 = vadd.f32 %v48, %v192
  %194 = vdwg.mxu0
  %v195 = vmax.f32 %v156, 0.0
  %v196 = vmax.f32 %v158, 0.0
  %v197 = vmax.f32 %v161, 0.0
  %v198 = vmax.f32 %v163, 0.0
  %v199 = vmax.f32 %v166, 0.0
  %v200 = vmax.f32 %v168, 0.0
  %v201 = vmax.f32 %v171, 0.0
  %v202 = vmax.f32 %v173, 0.0
  %v203 = vmax.f32 %v176, 0.0
  %v204 = vmax.f32 %v178, 0.0
  %v205 = vmax.f32 %v181, 0.0
  %v206 = vmax.f32 %v183, 0.0
  %v207 = vmax.f32 %v186, 0.0
  %v208 = vmax.f32 %v188, 0.0
  %v209 = vmax.f32 %v191, 0.0
  %v210 = vmax.f32 %v193, 0.0
  %v211 = vpack.c.bf16 %v195, %v195
  %v212 = vpack.c.bf16 %v196, %v196
  %v213 = vpack.c.bf16 %v197, %v197
  %v214 = vpack.c.bf16 %v198, %v198
  %v215 = vpack.c.bf16 %v199, %v199
  %v216 = vpack.c.bf16 %v200, %v200
  %v217 = vpack.c.bf16 %v201, %v201
  %v218 = vpack.c.bf16 %v202, %v202
  %v219 = vpack.c.bf16 %v203, %v203
  %v220 = vpack.c.bf16 %v204, %v204
  %v221 = vpack.c.bf16 %v205, %v205
  %v222 = vpack.c.bf16 %v206, %v206
  %v223 = vpack.c.bf16 %v207, %v207
  %v224 = vpack.c.bf16 %v208, %v208
  %v225 = vpack.c.bf16 %v209, %v209
  %v226 = vpack.c.bf16 %v210, %v210
  %227 = vst [vmem:[%s3] sm:$0xf] %v211
  %228 = vst [vmem:[%s3 + $0x4] sm:$0xf] %v212
  %229 = vst [vmem:[%s3 + $0x8] sm:$0xf] %v213
  %230 = vst [vmem:[%s3 + $0xc] sm:$0xf] %v214
  %231 = vst [vmem:[%s3 + $0x10] sm:$0xf] %v215
  %232 = vst [vmem:[%s3 + $0x14] sm:$0xf] %v216
  %233 = vst [vmem:[%s3 + $0x18] sm:$0xf] %v217
  %234 = vst [vmem:[%s3 + $0x1c] sm:$0xf] %v218
  %235 = vst [vmem:[%s3 + $0x20] sm:$0xf] %v219
  %236 = vst [vmem:[%s3 + $0x24] sm:$0xf] %v220
  %237 = vst [vmem:[%s3 + $0x28] sm:$0xf] %v221
  %238 = vst [vmem:[%s3 + $0x2c] sm:$0xf] %v222
  %239 = vst [vmem:[%s3 + $0x30] sm:$0xf] %v223
  %240 = vst [vmem:[%s3 + $0x34] sm:$0xf] %v224
  %241 = vst [vmem:[%s3 + $0x38] sm:$0xf] %v225
  %242 = vst [vmem:[%s3 + $0x3c] sm:$0xf] %v226
  // Predicated region
  $region14: #{gconv_forward.5} parent=0 // pred_check
    _
  $region15: #{gconv_forward.5} parent=0 // pred_check_branch
    %244 = sbr.rel (0) target = $region17
  $region16: #{gconv_forward.5} parent=0 // pred_region
    _
  $region17: #{gconv_forward.5} parent=0 // pred_fallthru
    _
  // Predicated region
  $region18: #{gconv_forward.5} parent=0 // pred_check
    _
  $region19: #{gconv_forward.5} parent=0 // pred_check_branch
    %246 = sbr.rel (0) target = $region21
  $region20: #{gconv_forward.5} parent=0 // pred_region
    _
  $region21: #{gconv_forward.5} parent=0 // pred_fallthru
    _

</llo_original>
